<compile_context>
chip_gen: v7x
topology: tpu7x:2x2x1
jax: 0.10.0
libtpu: 0.0.40
codegen_flags: <defaults>
</compile_context>

<pallas_src>
import functools

import jax
import jax.numpy as jnp
from jax.experimental import pallas as pl
from jax.experimental.pallas import tpu as pltpu


def scombiner_kernel(s1_ref, s2_ref, wb_ref, inv_sigma_ref, o_ref, *, n, cin, cout):
    # s1_ref : (n*cout, L)   skip input (aliased with o_ref)
    # s2_ref : (n*cin,  L)   conv input, one dense sublane tile
    # wb_ref : (cout, cin+1) packed RAW conv weight (cols 0..cin-1) + bias (col cin)
    # inv_sigma_ref : (1,) f32 in SMEM -> 1/sigma from the power iteration
    # o_ref  : (n*cout, L)
    L = o_ref.shape[-1]
    inv_sigma = inv_sigma_ref[0]

    wb = wb_ref[...].astype(jnp.float32)                           # (cout, cin+1)

    # Hoisted out of the batch loop: spectral-norm scale + per-input-channel
    # lane-broadcast weight columns, and the bias broadcast.
    w_cols = [
        jnp.broadcast_to(wb[:, c:c + 1] * inv_sigma, (cout, L)) for c in range(cin)
    ]
    bias_b = jnp.broadcast_to(wb[:, cin:cin + 1], (cout, L))       # (cout, L)

    # N=2, Cin=4: fully unrolled VPU accumulate (no MXU, no cross-lane reduce).
    for b in range(n):
        x = s2_ref[b * cin:(b + 1) * cin, :].astype(jnp.float32)          # (cin, L)
        acc = s1_ref[b * cout:(b + 1) * cout, :].astype(jnp.float32) + bias_b
        for c in range(cin):
            acc = acc + w_cols[c] * jnp.broadcast_to(x[c:c + 1, :], (cout, L))
        o_ref[b * cout:(b + 1) * cout, :] = acc.astype(o_ref.dtype)


def spectral_inv_sigma(weight, u, eps=1e-12):
    """One power iteration (torch spectral_norm training-mode forward, dim=0,
    n_power_iterations=1) -> returns 1/sigma.  Uses max(||.||, eps) like
    torch.nn.functional.normalize."""
    cout = weight.shape[0]
    w_mat = weight.reshape(cout, -1)                 # (Cout, Cin*KH*KW)
    v = w_mat.T @ u
    v = v / jnp.maximum(jnp.linalg.norm(v), eps)
    u_new = w_mat @ v
    u_new = u_new / jnp.maximum(jnp.linalg.norm(u_new), eps)
    sigma = u_new @ (w_mat @ v)
    # TODO(synk): torch updates the `u` buffer in-place during training-mode
    # forward; this functional version does not propagate u_new to the caller.
    return 1.0 / sigma


@jax.jit
def scombiner_forward(s1, s2, weight, bias, u):
    """SCombiner.forward: s1 + spectral_norm(Conv2d(Cin, Cout, 1, 1, 0))(s2).

    s1: (N, Cout, H, W);  s2: (N, Cin, H, W)
    weight: (Cout, Cin, 1, 1);  bias: (Cout,);  u: (Cout,) power-iteration vector.
    """
    n, cin, h, w = s2.shape
    cout = weight.shape[0]
    L = h * w                                        # 256 -> lane-dense last dim

    # Tiny parameter glue (fused into the same jit executable):
    inv_sigma = spectral_inv_sigma(weight, u).reshape(1).astype(jnp.float32)
    # Pack raw weight + bias into one operand; independent of the sigma chain,
    # so its DMA is not gated by the power iteration.
    wb = jnp.concatenate([weight.reshape(cout, cin), bias.reshape(cout, 1)], axis=1)

    # Pure reshapes of contiguous NCHW (no transposes, no copies).
    s1_flat = s1.reshape(n * cout, L)
    s2_flat = s2.reshape(n * cin, L)

    kernel = functools.partial(scombiner_kernel, n=n, cin=cin, cout=cout)

    out_flat = pl.pallas_call(
        kernel,
        out_shape=jax.ShapeDtypeStruct((n * cout, L), s1.dtype),
        grid_spec=pltpu.PrefetchScalarGridSpec(
            num_scalar_prefetch=0,
            grid=(1,),                               # collapsed: launch-bound shapes
            in_specs=[
                pl.BlockSpec((n * cout, L), lambda i: (0, 0)),     # s1 (aliased)
                pl.BlockSpec((n * cin, L), lambda i: (0, 0)),      # s2
                pl.BlockSpec((cout, cin + 1), lambda i: (0, 0)),   # packed w+b
                pl.BlockSpec(memory_space=pltpu.MemorySpace.SMEM), # 1/sigma scalar
            ],
            out_specs=pl.BlockSpec((n * cout, L), lambda i: (0, 0)),
        ),
        input_output_aliases={0: 0},                 # s1 is dead after the add
        compiler_params=pltpu.CompilerParams(
            dimension_semantics=("arbitrary",)),
    )(s1_flat, s2_flat, wb, inv_sigma)

    # Lane-dense output -> NCHW is a pure reshape (no transpose).
    return out_flat.reshape(n, cout, h, w)


def _reference_forward(s1, s2, weight, bias, u):
    """Pure-JAX reference (lax conv) for correctness checking."""
    w_sn = weight * spectral_inv_sigma(weight, u)
    conv = jax.lax.conv_general_dilated(
        s2, w_sn,
        window_strides=(1, 1),
        padding=((0, 0), (0, 0)),
        dimension_numbers=("NCHW", "OIHW", "NCHW"),
    )
    return s1 + conv + bias[None, :, None, None]


if __name__ == "__main__":
    # Small shapes consistent with the module: in_channels=4, out_channels=8.
    N, CIN, COUT, H, W = 2, 4, 8, 16, 16

    key = jax.random.PRNGKey(0)
    k1, k2, kw, kb, ku = jax.random.split(key, 5)

    s1 = jax.random.normal(k1, (N, COUT, H, W), dtype=jnp.float32)
    s2 = jax.random.normal(k2, (N, CIN, H, W), dtype=jnp.float32)

    # Deterministic parameter init (shapes of nn.Conv2d(4, 8, 1, 1, 0, bias=True)).
    fan_in = CIN * 1 * 1
    weight = jax.random.normal(kw, (COUT, CIN, 1, 1), dtype=jnp.float32) / jnp.sqrt(fan_in)
    bias = jax.random.normal(kb, (COUT,), dtype=jnp.float32) * 0.05
    # Spectral-norm power-iteration vector (torch initializes it randomly, normalized).
    u0 = jax.random.normal(ku, (COUT,), dtype=jnp.float32)
    u0 = u0 / jnp.linalg.norm(u0)

    out = scombiner_forward(s1, s2, weight, bias, u0)
    out = jax.block_until_ready(out)

    ref = _reference_forward(s1, s2, weight, bias, u0)
    assert out.shape == (N, COUT, H, W), out.shape
    assert jnp.allclose(out, ref, rtol=1e-5, atol=1e-5), float(jnp.max(jnp.abs(out - ref)))

    print("KERNEL_OK")
</pallas_src>

<mosaic_0001>
module attributes {stable_mosaic.version = 11 : i64} {
  func.func @scombiner_kernel(%arg0: i32, %arg1: memref<16x256xf32, #tpu.memory_space<vmem>>, %arg2: memref<8x256xf32, #tpu.memory_space<vmem>>, %arg3: memref<8x5xf32, #tpu.memory_space<vmem>>, %arg4: memref<1xf32, #tpu.memory_space<smem>>, %arg5: memref<16x256xf32, #tpu.memory_space<vmem>>) attributes {dimension_semantics = [#tpu.dimension_semantics<arbitrary>], iteration_bounds = array<i64: 1>, scalar_prefetch = 0 : i64, scratch_operands = 0 : i64, tpu.core_type = #tpu.core_type<tc>, window_params = [{pipeline_mode = #tpu.pipeline_mode<synchronous>, transform_indices = @transform_0, window_bounds = array<i64: 16, 256>}, {pipeline_mode = #tpu.pipeline_mode<synchronous>, transform_indices = @transform_1, window_bounds = array<i64: 8, 256>}, {pipeline_mode = #tpu.pipeline_mode<synchronous>, transform_indices = @transform_2, window_bounds = array<i64: 8, 5>}, {transform_indices = @transform_3, window_bounds = array<i64: 1>}, {pipeline_mode = #tpu.pipeline_mode<synchronous>, transform_indices = @transform_4, window_bounds = array<i64: 16, 256>}]} {
    %c0 = arith.constant 0 : index
    %0 = memref.load %arg4[%c0] : memref<1xf32, #tpu.memory_space<smem>>
    %c0_0 = arith.constant 0 : index
    %c0_1 = arith.constant 0 : index
    %1 = vector.load %arg3[%c0_0, %c0_1] : memref<8x5xf32, #tpu.memory_space<vmem>>, vector<8x5xf32>
    %2 = vector.extract_strided_slice %1 {offsets = [0, 0], sizes = [8, 1], strides = [1, 1]} : vector<8x5xf32> to vector<8x1xf32>
    %3 = vector.broadcast %0 : f32 to vector<8x1xf32>
    %4 = arith.mulf %2, %3 : vector<8x1xf32>
    %5 = vector.shape_cast %4 : vector<8x1xf32> to vector<8x1xf32>
    %6 = vector.broadcast %5 : vector<8x1xf32> to vector<8x256xf32>
    %7 = vector.extract_strided_slice %1 {offsets = [0, 1], sizes = [8, 1], strides = [1, 1]} : vector<8x5xf32> to vector<8x1xf32>
    %8 = vector.broadcast %0 : f32 to vector<8x1xf32>
    %9 = arith.mulf %7, %8 : vector<8x1xf32>
    %10 = vector.shape_cast %9 : vector<8x1xf32> to vector<8x1xf32>
    %11 = vector.broadcast %10 : vector<8x1xf32> to vector<8x256xf32>
    %12 = vector.extract_strided_slice %1 {offsets = [0, 2], sizes = [8, 1], strides = [1, 1]} : vector<8x5xf32> to vector<8x1xf32>
    %13 = vector.broadcast %0 : f32 to vector<8x1xf32>
    %14 = arith.mulf %12, %13 : vector<8x1xf32>
    %15 = vector.shape_cast %14 : vector<8x1xf32> to vector<8x1xf32>
    %16 = vector.broadcast %15 : vector<8x1xf32> to vector<8x256xf32>
    %17 = vector.extract_strided_slice %1 {offsets = [0, 3], sizes = [8, 1], strides = [1, 1]} : vector<8x5xf32> to vector<8x1xf32>
    %18 = vector.broadcast %0 : f32 to vector<8x1xf32>
    %19 = arith.mulf %17, %18 : vector<8x1xf32>
    %20 = vector.shape_cast %19 : vector<8x1xf32> to vector<8x1xf32>
    %21 = vector.broadcast %20 : vector<8x1xf32> to vector<8x256xf32>
    %22 = vector.extract_strided_slice %1 {offsets = [0, 4], sizes = [8, 1], strides = [1, 1]} : vector<8x5xf32> to vector<8x1xf32>
    %23 = vector.shape_cast %22 : vector<8x1xf32> to vector<8x1xf32>
    %24 = vector.broadcast %23 : vector<8x1xf32> to vector<8x256xf32>
    %c0_2 = arith.constant 0 : index
    %c0_3 = arith.constant 0 : index
    %25 = vector.load %arg2[%c0_2, %c0_3] : memref<8x256xf32, #tpu.memory_space<vmem>>, vector<4x256xf32>
    %c0_4 = arith.constant 0 : index
    %c0_5 = arith.constant 0 : index
    %26 = vector.load %arg1[%c0_4, %c0_5] : memref<16x256xf32, #tpu.memory_space<vmem>>, vector<8x256xf32>
    %27 = arith.addf %26, %24 : vector<8x256xf32>
    %28 = vector.extract_strided_slice %25 {offsets = [0, 0], sizes = [1, 256], strides = [1, 1]} : vector<4x256xf32> to vector<1x256xf32>
    %29 = vector.shape_cast %28 : vector<1x256xf32> to vector<1x256xf32>
    %30 = vector.broadcast %29 : vector<1x256xf32> to vector<8x256xf32>
    %31 = arith.mulf %6, %30 : vector<8x256xf32>
    %32 = arith.addf %27, %31 : vector<8x256xf32>
    %33 = vector.extract_strided_slice %25 {offsets = [1, 0], sizes = [1, 256], strides = [1, 1]} : vector<4x256xf32> to vector<1x256xf32>
    %34 = vector.shape_cast %33 : vector<1x256xf32> to vector<1x256xf32>
    %35 = vector.broadcast %34 : vector<1x256xf32> to vector<8x256xf32>
    %36 = arith.mulf %11, %35 : vector<8x256xf32>
    %37 = arith.addf %32, %36 : vector<8x256xf32>
    %38 = vector.extract_strided_slice %25 {offsets = [2, 0], sizes = [1, 256], strides = [1, 1]} : vector<4x256xf32> to vector<1x256xf32>
    %39 = vector.shape_cast %38 : vector<1x256xf32> to vector<1x256xf32>
    %40 = vector.broadcast %39 : vector<1x256xf32> to vector<8x256xf32>
    %41 = arith.mulf %16, %40 : vector<8x256xf32>
    %42 = arith.addf %37, %41 : vector<8x256xf32>
    %43 = vector.extract_strided_slice %25 {offsets = [3, 0], sizes = [1, 256], strides = [1, 1]} : vector<4x256xf32> to vector<1x256xf32>
    %44 = vector.shape_cast %43 : vector<1x256xf32> to vector<1x256xf32>
    %45 = vector.broadcast %44 : vector<1x256xf32> to vector<8x256xf32>
    %46 = arith.mulf %21, %45 : vector<8x256xf32>
    %47 = arith.addf %42, %46 : vector<8x256xf32>
    %c0_6 = arith.constant 0 : index
    %c0_7 = arith.constant 0 : index
    %48 = vector.load %arg5[%c0_6, %c0_7] : memref<16x256xf32, #tpu.memory_space<vmem>>, vector<8x256xf32>
    tpu.vector_store %arg5[%c0_6, %c0_7], %47 {strides = array<i32>} : memref<16x256xf32, #tpu.memory_space<vmem>>, vector<8x256xf32>,
    %c4 = arith.constant 4 : index
    %c0_8 = arith.constant 0 : index
    %49 = vector.load %arg2[%c4, %c0_8] : memref<8x256xf32, #tpu.memory_space<vmem>>, vector<4x256xf32>
    %c8 = arith.constant 8 : index
    %c0_9 = arith.constant 0 : index
    %50 = vector.load %arg1[%c8, %c0_9] : memref<16x256xf32, #tpu.memory_space<vmem>>, vector<8x256xf32>
    %51 = arith.addf %50, %24 : vector<8x256xf32>
    %52 = vector.extract_strided_slice %49 {offsets = [0, 0], sizes = [1, 256], strides = [1, 1]} : vector<4x256xf32> to vector<1x256xf32>
    %53 = vector.shape_cast %52 : vector<1x256xf32> to vector<1x256xf32>
    %54 = vector.broadcast %53 : vector<1x256xf32> to vector<8x256xf32>
    %55 = arith.mulf %6, %54 : vector<8x256xf32>
    %56 = arith.addf %51, %55 : vector<8x256xf32>
    %57 = vector.extract_strided_slice %49 {offsets = [1, 0], sizes = [1, 256], strides = [1, 1]} : vector<4x256xf32> to vector<1x256xf32>
    %58 = vector.shape_cast %57 : vector<1x256xf32> to vector<1x256xf32>
    %59 = vector.broadcast %58 : vector<1x256xf32> to vector<8x256xf32>
    %60 = arith.mulf %11, %59 : vector<8x256xf32>
    %61 = arith.addf %56, %60 : vector<8x256xf32>
    %62 = vector.extract_strided_slice %49 {offsets = [2, 0], sizes = [1, 256], strides = [1, 1]} : vector<4x256xf32> to vector<1x256xf32>
    %63 = vector.shape_cast %62 : vector<1x256xf32> to vector<1x256xf32>
    %64 = vector.broadcast %63 : vector<1x256xf32> to vector<8x256xf32>
    %65 = arith.mulf %16, %64 : vector<8x256xf32>
    %66 = arith.addf %61, %65 : vector<8x256xf32>
    %67 = vector.extract_strided_slice %49 {offsets = [3, 0], sizes = [1, 256], strides = [1, 1]} : vector<4x256xf32> to vector<1x256xf32>
    %68 = vector.shape_cast %67 : vector<1x256xf32> to vector<1x256xf32>
    %69 = vector.broadcast %68 : vector<1x256xf32> to vector<8x256xf32>
    %70 = arith.mulf %21, %69 : vector<8x256xf32>
    %71 = arith.addf %66, %70 : vector<8x256xf32>
    %c8_10 = arith.constant 8 : index
    %c0_11 = arith.constant 0 : index
    %72 = vector.load %arg5[%c8_10, %c0_11] : memref<16x256xf32, #tpu.memory_space<vmem>>, vector<8x256xf32>
    tpu.vector_store %arg5[%c8_10, %c0_11], %71 {strides = array<i32>} : memref<16x256xf32, #tpu.memory_space<vmem>>, vector<8x256xf32>,
    return
  }
  func.func @transform_0(%arg0: i32) -> (i32, i32) {
    %c0_i32 = arith.constant 0 : i32
    %c0_i32_0 = arith.constant 0 : i32
    %c0_i32_1 = arith.constant 0 : i32
    return %c0_i32, %c0_i32_0 : i32, i32
  }
  func.func @transform_1(%arg0: i32) -> (i32, i32) {
    %c0_i32 = arith.constant 0 : i32
    %c0_i32_0 = arith.constant 0 : i32
    %c0_i32_1 = arith.constant 0 : i32
    return %c0_i32, %c0_i32_0 : i32, i32
  }
  func.func @transform_2(%arg0: i32) -> (i32, i32) {
    %c0_i32 = arith.constant 0 : i32
    %c0_i32_0 = arith.constant 0 : i32
    %c0_i32_1 = arith.constant 0 : i32
    return %c0_i32, %c0_i32_0 : i32, i32
  }
  func.func @transform_3(%arg0: i32) -> i32 {
    %c0_i32 = arith.constant 0 : i32
    %c0_i32_0 = arith.constant 0 : i32
    return %c0_i32 : i32
  }
  func.func @transform_4(%arg0: i32) -> (i32, i32) {
    %c0_i32 = arith.constant 0 : i32
    %c0_i32_0 = arith.constant 0 : i32
    %c0_i32_1 = arith.constant 0 : i32
    return %c0_i32, %c0_i32_0 : i32, i32
  }
}

</mosaic_0001>

<llo_original>
// kernel: scombiner_forward.1
$region0: #{scombiner_forward.1}
  #allocation0 [shape = 'u32[]', space=smem, size = 0x4, offset = 0x4, fixed_abs, tag = 'smem constant byte address 0x4 - core index']
  #allocation1 [shape = 'u32[144,128]{1,0:T(1,128)}', space=vmem, size = 0x12000, scoped, tag = 'internal scratch']
  #allocation2 [shape = 'f32[1]{0:T(128)S(6)}', space=smem, size = 0x200, scoped, tag = 'scoped memory for scombiner_forward.1']
  %s0 = inlined_call_operand.vmem [shape: f32[16,256], index: 0, kind: input, shape index: {}, may-alias: {0,4}]
  %s1 = inlined_call_operand.vmem [shape: f32[8,256], index: 1, kind: input, shape index: {}]
  %s2 = inlined_call_operand.vmem [shape: f32[8,5], index: 2, kind: input, shape index: {}]
  %s3 = inlined_call_operand.<no memory space> [shape: f32[1], index: 3, kind: input, shape index: {}]
  %s4 = inlined_call_operand.vmem [shape: f32[16,256], index: 4, kind: output, shape index: {}, may-alias: {0,4}]
  %s5 = sld [smem:[#allocation0]]
  $region26: #{scombiner_forward.1} parent=0
    _
  %s7 = ssub.s32 1, %s5
  %s8 = scalar_select 0, %s7, %s5
  %9 = sst [smem:[#allocation2]] %s3
  // Predicated region
  $region2: #{scombiner_forward.1} parent=0 // pred_check
    _
  $region3: #{scombiner_forward.1} parent=0 // pred_check_branch
    %11 = sbr.rel (0) target = $region5
  $region4: #{scombiner_forward.1} parent=0 // pred_region
    _
  $region5: #{scombiner_forward.1} parent=0 // pred_fallthru
    _
  // Predicated region
  $region6: #{scombiner_forward.1} parent=0 // pred_check
    _
  $region7: #{scombiner_forward.1} parent=0 // pred_check_branch
    %13 = sbr.rel (0) target = $region9
  $region8: #{scombiner_forward.1} parent=0 // pred_region
    _
  $region9: #{scombiner_forward.1} parent=0 // pred_fallthru
    _
  // Predicated region
  $region10: #{scombiner_forward.1} parent=0 // pred_check
    _
  $region11: #{scombiner_forward.1} parent=0 // pred_check_branch
    %15 = sbr.rel (0) target = $region13
  $region12: #{scombiner_forward.1} parent=0 // pred_region
    _
  $region13: #{scombiner_forward.1} parent=0 // pred_fallthru
    _
  // Predicated region
  $region14: #{scombiner_forward.1} parent=0 // pred_check
    _
  $region15: #{scombiner_forward.1} parent=0 // pred_check_branch
    %17 = sbr.rel (0) target = $region17
  $region16: #{scombiner_forward.1} parent=0 // pred_region
    _
  $region17: #{scombiner_forward.1} parent=0 // pred_fallthru
    _
  %s18 = sld [smem:[#allocation2]]
  %v19 = vld [vmem:[%s2] sm:$0xff]
  %v20 = vstv %s18
  %v21 = vmul.f32 %v19, %v20
  %23 = vset.pattern.permute.xlu0 0
  %24 = vperm.xlu0 %23, %v21
  %v25 = vpop.permute.xlu0 %24
  %27 = vset.pattern.permute.xlu0 1
  %28 = vperm.xlu0 %27, %v21
  %v29 = vpop.permute.xlu0 %28
  %31 = vset.pattern.permute.xlu0 2
  %32 = vperm.xlu0 %31, %v21
  %v33 = vpop.permute.xlu0 %32
  %35 = vset.pattern.permute.xlu0 3
  %36 = vperm.xlu0 %35, %v21
  %v37 = vpop.permute.xlu0 %36
  %40 = vset.pattern.permute.xlu0 4
  %41 = vperm.xlu0 %40, %v19
  %v42 = vpop.permute.xlu0 %41
  %v44 = vld [vmem:[%s1] sm:$0xf]
  %v45 = vld [vmem:[%s1 + $0x8] sm:$0xf]
  %v46 = vld [vmem:[%s0] sm:$0xff]
  %v47 = vld [vmem:[%s0 + $0x8] sm:$0xff]
  %v48 = vadd.f32 %v46, %v42
  %v49 = vadd.f32 %v47, %v42
  %v50 = vlaneseq
  %v51 = vshrl.u32 %v50, 7
  %v52 = vsub.s32 0, %v51
  %v53 = vrot.slane %v44, %v52
  %v54 = vlaneseq
  %v55 = vshrl.u32 %v54, 7
  %v56 = vsub.s32 0, %v55
  %v57 = vrot.slane %v45, %v56
  %v58 = vmul.f32 %v25, %v53
  %v59 = vmul.f32 %v25, %v57
  %v60 = vadd.f32 %v48, %v58
  %v61 = vadd.f32 %v49, %v59
  %v62 = vlaneseq
  %v63 = vshrl.u32 %v62, 7
  %v64 = vsub.s32 1, %v63
  %v65 = vrot.slane %v44, %v64
  %v66 = vlaneseq
  %v67 = vshrl.u32 %v66, 7
  %v68 = vsub.s32 1, %v67
  %v69 = vrot.slane %v45, %v68
  %v70 = vmul.f32 %v29, %v65
  %v71 = vmul.f32 %v29, %v69
  %v72 = vadd.f32 %v60, %v70
  %v73 = vadd.f32 %v61, %v71
  %v74 = vlaneseq
  %v75 = vshrl.u32 %v74, 7
  %v76 = vsub.s32 2, %v75
  %v77 = vrot.slane %v44, %v76
  %v78 = vlaneseq
  %v79 = vshrl.u32 %v78, 7
  %v80 = vsub.s32 2, %v79
  %v81 = vrot.slane %v45, %v80
  %v82 = vmul.f32 %v33, %v77
  %v83 = vmul.f32 %v33, %v81
  %v84 = vadd.f32 %v72, %v82
  %v85 = vadd.f32 %v73, %v83
  %v86 = vlaneseq
  %v87 = vshrl.u32 %v86, 7
  %v88 = vsub.s32 3, %v87
  %v89 = vrot.slane %v44, %v88
  %v90 = vlaneseq
  %v91 = vshrl.u32 %v90, 7
  %v92 = vsub.s32 3, %v91
  %v93 = vrot.slane %v45, %v92
  %v94 = vmul.f32 %v37, %v89
  %v95 = vmul.f32 %v37, %v93
  %v96 = vadd.f32 %v84, %v94
  %v97 = vadd.f32 %v85, %v95
  %98 = vst [vmem:[%s4] sm:$0xff] %v96
  %99 = vst [vmem:[%s4 + $0x8] sm:$0xff] %v97
  %v100 = vld [vmem:[%s1] sm:$0xf0]
  %v101 = vld [vmem:[%s1 + $0x8] sm:$0xf0]
  %v102 = vld [vmem:[%s0 + $0x10] sm:$0xff]
  %v103 = vld [vmem:[%s0 + $0x18] sm:$0xff]
  %v104 = vadd.f32 %v102, %v42
  %v105 = vadd.f32 %v103, %v42
  %v106 = vlaneseq
  %v107 = vshrl.u32 %v106, 7
  %v108 = vsub.s32 4, %v107
  %v109 = vrot.slane %v100, %v108
  %v110 = vlaneseq
  %v111 = vshrl.u32 %v110, 7
  %v112 = vsub.s32 4, %v111
  %v113 = vrot.slane %v101, %v112
  %v114 = vmul.f32 %v25, %v109
  %v115 = vmul.f32 %v25, %v113
  %v116 = vadd.f32 %v104, %v114
  %v117 = vadd.f32 %v105, %v115
  %v118 = vlaneseq
  %v119 = vshrl.u32 %v118, 7
  %v120 = vsub.s32 5, %v119
  %v121 = vrot.slane %v100, %v120
  %v122 = vlaneseq
  %v123 = vshrl.u32 %v122, 7
  %v124 = vsub.s32 5, %v123
  %v125 = vrot.slane %v101, %v124
  %v126 = vmul.f32 %v29, %v121
  %v127 = vmul.f32 %v29, %v125
  %v128 = vadd.f32 %v116, %v126
  %v129 = vadd.f32 %v117, %v127
  %v130 = vlaneseq
  %v131 = vshrl.u32 %v130, 7
  %v132 = vsub.s32 6, %v131
  %v133 = vrot.slane %v100, %v132
  %v134 = vlaneseq
  %v135 = vshrl.u32 %v134, 7
  %v136 = vsub.s32 6, %v135
  %v137 = vrot.slane %v101, %v136
  %v138 = vmul.f32 %v33, %v133
  %v139 = vmul.f32 %v33, %v137
  %v140 = vadd.f32 %v128, %v138
  %v141 = vadd.f32 %v129, %v139
  %v142 = vlaneseq
  %v143 = vshrl.u32 %v142, 7
  %v144 = vsub.s32 7, %v143
  %v145 = vrot.slane %v100, %v144
  %v146 = vlaneseq
  %v147 = vshrl.u32 %v146, 7
  %v148 = vsub.s32 7, %v147
  %v149 = vrot.slane %v101, %v148
  %v150 = vmul.f32 %v37, %v145
  %v151 = vmul.f32 %v37, %v149
  %v152 = vadd.f32 %v140, %v150
  %v153 = vadd.f32 %v141, %v151
  %154 = vst [vmem:[%s4 + $0x10] sm:$0xff] %v152
  %155 = vst [vmem:[%s4 + $0x18] sm:$0xff] %v153
  // Predicated region
  $region18: #{scombiner_forward.1} parent=0 // pred_check
    _
  $region19: #{scombiner_forward.1} parent=0 // pred_check_branch
    %157 = sbr.rel (0) target = $region21
  $region20: #{scombiner_forward.1} parent=0 // pred_region
    _
  $region21: #{scombiner_forward.1} parent=0 // pred_fallthru
    _
  // Predicated region
  $region22: #{scombiner_forward.1} parent=0 // pred_check
    _
  $region23: #{scombiner_forward.1} parent=0 // pred_check_branch
    %159 = sbr.rel (0) target = $region25
  $region24: #{scombiner_forward.1} parent=0 // pred_region
    _
  $region25: #{scombiner_forward.1} parent=0 // pred_fallthru
    _

</llo_original>
